<compile_context>
chip_gen: v7x
topology: tpu7x:2x2x1
jax: 0.10.0
libtpu: 0.0.40
codegen_flags: <defaults>
</compile_context>

<pallas_src>
import jax
import jax.numpy as jnp
from jax.experimental import pallas as pl
from jax.experimental.pallas import tpu as pltpu

EPS = 1e-5                        # nn.BatchNorm1d default eps
_VMEM_LIMIT = 40 * 1024 * 1024    # explicit scoped-VMEM budget (safe on v7x 64 MiB/TC)
_TILE_VMEM_BUDGET = 20 * 1024 * 1024


def _pick_batch_tile(B, L, Dp):
    """Batch-tile heuristic: fill the MXU M dim (>= 512 rows) if possible, keep
    >= 2 grid steps for v7x's two TensorCores, and stay inside the VMEM budget."""
    def fits(bt):
        # x f32 (2 bufs) + y bf16 (2 bufs) + 2 rolled f32 copies + bf16 xc (3*Dp
        # lanes) + f32 accumulator, plus the resident bf16 weight (2 bufs).
        return (bt * L * Dp * (2 * 4 + 2 * 2 + 2 * 4 + 3 * 2 + 4)
                + 3 * Dp * Dp * 2 * 2) <= _TILE_VMEM_BUDGET

    cands = [d for d in range(1, B + 1) if B % d == 0 and fits(d)]
    if not cands:
        return 1
    for d in cands:                       # smallest tile that fills the MXU M dim
        if d * L >= 512 and B // d >= 2:
            return d
    for d in cands:
        if d * L >= 512:
            return d
    two_step = [d for d in cands if B // d >= 2]
    return (two_step or cands)[-1]


def _conv_stats_kernel(x_ref, w_ref, y_ref, stats_ref):
    """Circular Conv1d(k=3) as one fused (Bt*L, 3Dp)x(3Dp, Dp) bf16 MXU matmul
    (f32 accumulation) + per-tile per-channel (sum, centered sum-of-squares)."""
    Bt, L, Dp = x_ref.shape
    M = Bt * L
    x = x_ref[...]                                          # (Bt, L, Dp)
    # Circular shifts along L within each batch element (XLU; no padded scratch,
    # no misaligned sublane slices).  pltpu.roll matches jnp.roll semantics.
    x_prev = pltpu.roll(x, 1, axis=1)                       # x[b, (l-1) % L]
    x_next = pltpu.roll(x, L - 1, axis=1)                   # x[b, (l+1) % L]

    def to_bf16(a):
        return a.reshape(M, Dp).astype(jnp.bfloat16)

    xc = jnp.concatenate([to_bf16(x_prev), to_bf16(x), to_bf16(x_next)],
                         axis=1)                            # (M, 3*Dp) bf16
    y = jnp.dot(xc, w_ref[...], preferred_element_type=jnp.float32)  # (M, Dp) f32

    # BN partial statistics from the f32 accumulator (Chan-combined in wrapper).
    s = jnp.sum(y, axis=0, keepdims=True)                   # (1, Dp)
    m = s * (1.0 / M)
    css = jnp.sum((y - m) * (y - m), axis=0, keepdims=True) # centered sum-of-sq
    stats_ref[...] = jnp.concatenate([s, css], axis=0).reshape(1, 2, Dp)

    # Pass-boundary intermediate stored in bf16 (halves the HBM round trip).
    y_ref[...] = y.reshape(Bt, L, Dp).astype(y_ref.dtype)


def _bn_relu_pool_kernel(yy_ref, scale_ref, shift_ref, o_ref):
    """Folded BatchNorm (single FMA) + ReLU + MaxPool1d(k=3, s=2, p=1).
    yy is the conv output viewed as (Bt, L/2, 2*Dp): lanes [0:Dp] = y[2j],
    lanes [Dp:2Dp] = y[2j+1]."""
    Bt, L2, Dp = o_ref.shape
    scale = scale_ref[...].reshape(1, 1, Dp)
    shift = shift_ref[...].reshape(1, 1, Dp)
    ye = yy_ref[:, :, :Dp].astype(jnp.float32)
    yo = yy_ref[:, :, Dp:].astype(jnp.float32)
    ze = jnp.maximum(ye * scale + shift, 0.0)                # z[2j]
    zo = jnp.maximum(yo * scale + shift, 0.0)                # z[2j+1]
    # z[2j-1] = z_odd[j-1]; PyTorch pads the j=0 window with -inf, which is
    # equivalent to a 0 pad after ReLU.  Roll (XLU) + one iota mask (VPU).
    zp = pltpu.roll(zo, 1, axis=1)
    row = jax.lax.broadcasted_iota(jnp.int32, zp.shape, 1)
    zp = jnp.where(row == 0, 0.0, zp)
    o_ref[...] = jnp.maximum(jnp.maximum(ze, zo), zp).astype(o_ref.dtype)


@jax.jit
def conv_layer(x, w, b, gamma, beta):
    """x: (B, L, D); w: (3, D, D) Conv1d weight in (k, in, out) layout
    (= PyTorch weight.permute(2, 1, 0)); b: (1, D) conv bias (mathematically
    cancelled by training-mode BN, so unused); gamma/beta: (1, D) BN affine.
    Returns (B, L//2, D), matching the PyTorch module."""
    del b  # exactly cancelled by training-mode BatchNorm mean subtraction
    B, L, D = x.shape
    assert L % 2 == 0, "vectorized max-pool assumes an even sequence length"
    L2 = L // 2
    f32 = jnp.float32

    # Lane-align channels so even small d_model hits the fused MXU path and
    # unmasked lane-dense stores.  Padded channels stay exactly zero end-to-end.
    Dp = ((D + 127) // 128) * 128
    if Dp != D:
        x = jnp.pad(x, ((0, 0), (0, 0), (0, Dp - D)))
        w = jnp.pad(w, ((0, 0), (0, Dp - D), (0, Dp - D)))
        gamma = jnp.pad(gamma, ((0, 0), (0, Dp - D)), constant_values=1.0)
        beta = jnp.pad(beta, ((0, 0), (0, Dp - D)))

    Bt = _pick_batch_tile(B, L, Dp)
    nT = B // Bt
    wc = w.reshape(3 * Dp, Dp).astype(jnp.bfloat16)          # fused-tap MXU weight

    # ---- Pass 1: circular conv (bf16 MXU, f32 acc) + per-tile BN partials ----
    y_conv, part = pl.pallas_call(
        _conv_stats_kernel,
        grid=(nT,),
        in_specs=[pl.BlockSpec((Bt, L, Dp), lambda i: (i, 0, 0)),
                  pl.BlockSpec((3 * Dp, Dp), lambda i: (0, 0))],
        out_specs=(pl.BlockSpec((Bt, L, Dp), lambda i: (i, 0, 0)),
                   pl.BlockSpec((1, 2, Dp), lambda i: (i, 0, 0))),
        out_shape=(jax.ShapeDtypeStruct((B, L, Dp), jnp.bfloat16),
                   jax.ShapeDtypeStruct((nT, 2, Dp), f32)),
        compiler_params=pltpu.CompilerParams(
            dimension_semantics=("parallel",),
            vmem_limit_bytes=_VMEM_LIMIT),
        cost_estimate=pl.CostEstimate(
            flops=2 * B * L * 3 * Dp * Dp,
            transcendentals=0,
            bytes_accessed=int(4 * B * L * Dp + 2 * B * L * Dp
                               + 2 * 3 * Dp * Dp + 4 * nT * 2 * Dp)),
    )(x, wc)

    # ---- Fold BN once (tiny XLA op): Chan-combined mean/var -> scale, shift ----
    n = float(Bt * L)
    N = float(B * L)
    s, css = part[:, 0, :], part[:, 1, :]                    # (nT, Dp)
    m_t = s / n
    mean = jnp.sum(s, axis=0) / N
    var = (jnp.sum(css, axis=0) + n * jnp.sum((m_t - mean) ** 2, axis=0)) / N
    scale_v = gamma.reshape(-1) * jax.lax.rsqrt(var + EPS)
    shift_v = beta.reshape(-1) - mean * scale_v
    scale = scale_v.reshape(1, Dp).astype(f32)
    shift = shift_v.reshape(1, Dp).astype(f32)

    # Free row-major view: lanes [0:Dp] = even rows, lanes [Dp:2Dp] = odd rows.
    y_pairs = y_conv.reshape(B, L2, 2 * Dp)

    # ---- Pass 2: folded BN + ReLU + MaxPool, dense lane-aligned stores ----
    out = pl.pallas_call(
        _bn_relu_pool_kernel,
        grid=(nT,),
        in_specs=[pl.BlockSpec((Bt, L2, 2 * Dp), lambda i: (i, 0, 0)),
                  pl.BlockSpec((1, Dp), lambda i: (0, 0)),
                  pl.BlockSpec((1, Dp), lambda i: (0, 0))],
        out_specs=pl.BlockSpec((Bt, L2, Dp), lambda i: (i, 0, 0)),
        out_shape=jax.ShapeDtypeStruct((B, L2, Dp), x.dtype),
        compiler_params=pltpu.CompilerParams(
            dimension_semantics=("parallel",),
            vmem_limit_bytes=_VMEM_LIMIT),
        cost_estimate=pl.CostEstimate(
            flops=8 * B * L2 * Dp,
            transcendentals=0,
            bytes_accessed=int(2 * B * L * Dp + 4 * B * L2 * Dp + 8 * Dp)),
    )(y_pairs, scale, shift)

    return out[:, :, :D] if Dp != D else out


def conv_layer_ref(x, w, b, gamma, beta, *,
                   matmul_dtype=jnp.float32, boundary_dtype=jnp.float32):
    """Pure-JAX reference mirroring the PyTorch forward (training-mode BN).
    `matmul_dtype` mirrors the kernel's bf16 MXU inputs; `boundary_dtype` mirrors
    the bf16 pass-boundary intermediate (stats are still taken in f32)."""
    B, L, D = x.shape
    xc = jnp.concatenate([jnp.roll(x, 1, axis=1), x, jnp.roll(x, -1, axis=1)],
                         axis=-1)
    y = jnp.einsum("blk,ko->blo", xc.astype(matmul_dtype),
                   w.reshape(3 * D, D).astype(matmul_dtype),
                   preferred_element_type=jnp.float32) + b
    mean = jnp.mean(y, axis=(0, 1), keepdims=True)
    var = jnp.mean((y - mean) ** 2, axis=(0, 1), keepdims=True)
    scale = gamma / jnp.sqrt(var + EPS)
    shift = beta - mean * scale
    z = jnp.maximum(y.astype(boundary_dtype).astype(jnp.float32) * scale + shift,
                    0.0)
    neg = jnp.full((B, 1, D), -jnp.inf, z.dtype)
    zp = jnp.concatenate([neg, z, neg], axis=1)
    L_out = (L - 1) // 2 + 1
    return jnp.stack([jnp.max(zp[:, 2 * j:2 * j + 3, :], axis=1)
                      for j in range(L_out)], axis=1)


if __name__ == "__main__":
    B, L, D = 2, 16, 32   # batch, seq_len, configs.d_model (small test shape)

    key = jax.random.PRNGKey(0)
    kx, kw, kb, kg, kbe = jax.random.split(key, 5)

    x = jax.random.normal(kx, (B, L, D), dtype=jnp.float32)
    # Conv1d weight in (k, in_ch, out_ch) layout (= PyTorch weight.permute(2,1,0)).
    w = jax.random.normal(kw, (3, D, D), dtype=jnp.float32) / jnp.sqrt(3.0 * D)
    b = 0.1 * jax.random.normal(kb, (1, D), dtype=jnp.float32)
    gamma = 1.0 + 0.1 * jax.random.normal(kg, (1, D), dtype=jnp.float32)
    beta = 0.1 * jax.random.normal(kbe, (1, D), dtype=jnp.float32)

    out = jax.block_until_ready(conv_layer(x, w, b, gamma, beta))
    assert out.shape == (B, L // 2, D), out.shape

    # Tight check vs a reference that mirrors the kernel's bf16 MXU inputs and
    # bf16 pass boundary (bias dropped: it cancels under training-mode BN).
    ref_mirror = conv_layer_ref(x, w, jnp.zeros_like(b), gamma, beta,
                                matmul_dtype=jnp.bfloat16,
                                boundary_dtype=jnp.bfloat16)
    err_mirror = float(jnp.max(jnp.abs(out - ref_mirror)))
    assert jnp.allclose(out, ref_mirror, atol=2e-3, rtol=2e-3), err_mirror

    # Loose check vs the full-f32 PyTorch-equivalent reference (differences are
    # only the bf16 rounding of MXU inputs and the pass-boundary intermediate).
    ref_f32 = conv_layer_ref(x, w, b, gamma, beta)
    err_f32 = float(jnp.max(jnp.abs(out - ref_f32)))
    assert jnp.allclose(out, ref_f32, atol=5e-2, rtol=5e-2), err_f32

    print("KERNEL_OK")
</pallas_src>

<mosaic_0001>
module attributes {stable_mosaic.version = 11 : i64} {
  func.func @_conv_stats_kernel(%arg0: i32, %arg1: memref<1x16x128xf32, #tpu.memory_space<vmem>>, %arg2: memref<384x128xbf16, #tpu.memory_space<vmem>>, %arg3: memref<1x16x128xbf16, #tpu.memory_space<vmem>>, %arg4: memref<1x2x128xf32, #tpu.memory_space<vmem>>) attributes {dimension_semantics = [#tpu.dimension_semantics<parallel>], iteration_bounds = array<i64: 2>, scalar_prefetch = 0 : i64, scratch_operands = 0 : i64, tpu.core_type = #tpu.core_type<tc>, window_params = [{transform_indices = @transform_0, window_bounds = array<i64: 1, 16, 128>}, {pipeline_mode = #tpu.pipeline_mode<synchronous>, transform_indices = @transform_1, window_bounds = array<i64: 384, 128>}, {transform_indices = @transform_2, window_bounds = array<i64: 1, 16, 128>}, {transform_indices = @transform_3, window_bounds = array<i64: 1, 2, 128>}]} {
    %c0 = arith.constant 0 : index
    %c0_0 = arith.constant 0 : index
    %c0_1 = arith.constant 0 : index
    %0 = vector.load %arg1[%c0, %c0_0, %c0_1] : memref<1x16x128xf32, #tpu.memory_space<vmem>>, vector<1x16x128xf32>
    %c1_i32 = arith.constant 1 : i32
    %1 = tpu.dynamic_rotate %0 by %c1_i32 dim 1 : vector<1x16x128xf32>, i32 -> vector<1x16x128xf32>
    %c15_i32 = arith.constant 15 : i32
    %2 = tpu.dynamic_rotate %0 by %c15_i32 dim 1 : vector<1x16x128xf32>, i32 -> vector<1x16x128xf32>
    %3 = vector.shape_cast %1 : vector<1x16x128xf32> to vector<16x128xf32>
    %4 = arith.truncf %3 : vector<16x128xf32> to vector<16x128xbf16>
    %5 = vector.shape_cast %0 : vector<1x16x128xf32> to vector<16x128xf32>
    %6 = arith.truncf %5 : vector<16x128xf32> to vector<16x128xbf16>
    %7 = vector.shape_cast %2 : vector<1x16x128xf32> to vector<16x128xf32>
    %8 = arith.truncf %7 : vector<16x128xf32> to vector<16x128xbf16>
    %9 = tpu.concatenate %4, %6, %8 in 1 : vector<16x128xbf16>, vector<16x128xbf16>, vector<16x128xbf16> -> vector<16x384xbf16>
    %c0_2 = arith.constant 0 : index
    %c0_3 = arith.constant 0 : index
    %10 = vector.load %arg2[%c0_2, %c0_3] : memref<384x128xbf16, #tpu.memory_space<vmem>>, vector<384x128xbf16>
    %cst = arith.constant dense<0.000000e+00> : vector<16x128xf32>
    %11 = tpu.matmul %9, %10, %cst {dimension_numbers = #tpu.dot_dimension_numbers<[1], [0], [0], [1], [0, 0, 1, 1], [], []>} : vector<16x384xbf16>, vector<384x128xbf16>, vector<16x128xf32> -> vector<16x128xf32>
    %cst_4 = arith.constant dense<0.000000e+00> : vector<128xf32>
    %12 = vector.multi_reduction <add>, %11, %cst_4 [0] : vector<16x128xf32> to vector<128xf32>
    %13 = vector.shape_cast %12 : vector<128xf32> to vector<1x128xf32>
    %cst_5 = arith.constant 6.250000e-02 : f32
    %14 = vector.broadcast %cst_5 : f32 to vector<1x128xf32>
    %15 = arith.mulf %13, %14 : vector<1x128xf32>
    %16 = vector.broadcast %15 : vector<1x128xf32> to vector<16x128xf32>
    %17 = arith.subf %11, %16 : vector<16x128xf32>
    %18 = vector.broadcast %15 : vector<1x128xf32> to vector<16x128xf32>
    %19 = arith.subf %11, %18 : vector<16x128xf32>
    %20 = arith.mulf %17, %19 : vector<16x128xf32>
    %cst_6 = arith.constant dense<0.000000e+00> : vector<128xf32>
    %21 = vector.multi_reduction <add>, %20, %cst_6 [0] : vector<16x128xf32> to vector<128xf32>
    %22 = vector.shape_cast %21 : vector<128xf32> to vector<1x128xf32>
    %23 = tpu.concatenate %13, %22 in 0 : vector<1x128xf32>, vector<1x128xf32> -> vector<2x128xf32>
    %24 = vector.shape_cast %23 : vector<2x128xf32> to vector<1x2x128xf32>
    %c0_7 = arith.constant 0 : index
    %c0_8 = arith.constant 0 : index
    %c0_9 = arith.constant 0 : index
    %25 = vector.load %arg4[%c0_7, %c0_8, %c0_9] : memref<1x2x128xf32, #tpu.memory_space<vmem>>, vector<1x2x128xf32>
    tpu.vector_store %arg4[%c0_7, %c0_8, %c0_9], %24 {strides = array<i32>} : memref<1x2x128xf32, #tpu.memory_space<vmem>>, vector<1x2x128xf32>,
    %26 = vector.shape_cast %11 : vector<16x128xf32> to vector<1x16x128xf32>
    %27 = arith.truncf %26 : vector<1x16x128xf32> to vector<1x16x128xbf16>
    %c0_10 = arith.constant 0 : index
    %c0_11 = arith.constant 0 : index
    %c0_12 = arith.constant 0 : index
    %28 = vector.load %arg3[%c0_10, %c0_11, %c0_12] : memref<1x16x128xbf16, #tpu.memory_space<vmem>>, vector<1x16x128xbf16>
    tpu.vector_store %arg3[%c0_10, %c0_11, %c0_12], %27 {strides = array<i32>} : memref<1x16x128xbf16, #tpu.memory_space<vmem>>, vector<1x16x128xbf16>,
    return
  }
  func.func @transform_0(%arg0: i32) -> (i32, i32, i32) {
    %c0_i32 = arith.constant 0 : i32
    %c0_i32_0 = arith.constant 0 : i32
    %c0_i32_1 = arith.constant 0 : i32
    return %arg0, %c0_i32, %c0_i32_0 : i32, i32, i32
  }
  func.func @transform_1(%arg0: i32) -> (i32, i32) {
    %c0_i32 = arith.constant 0 : i32
    %c0_i32_0 = arith.constant 0 : i32
    %c0_i32_1 = arith.constant 0 : i32
    return %c0_i32, %c0_i32_0 : i32, i32
  }
  func.func @transform_2(%arg0: i32) -> (i32, i32, i32) {
    %c0_i32 = arith.constant 0 : i32
    %c0_i32_0 = arith.constant 0 : i32
    %c0_i32_1 = arith.constant 0 : i32
    return %arg0, %c0_i32, %c0_i32_0 : i32, i32, i32
  }
  func.func @transform_3(%arg0: i32) -> (i32, i32, i32) {
    %c0_i32 = arith.constant 0 : i32
    %c0_i32_0 = arith.constant 0 : i32
    %c0_i32_1 = arith.constant 0 : i32
    return %arg0, %c0_i32, %c0_i32_0 : i32, i32, i32
  }
}

module attributes {stable_mosaic.version = 11 : i64} {
  func.func @_bn_relu_pool_kernel(%arg0: i32, %arg1: memref<1x8x256xbf16, #tpu.memory_space<vmem>>, %arg2: memref<1x128xf32, #tpu.memory_space<vmem>>, %arg3: memref<1x128xf32, #tpu.memory_space<vmem>>, %arg4: memref<1x8x128xf32, #tpu.memory_space<vmem>>) attributes {dimension_semantics = [#tpu.dimension_semantics<parallel>], iteration_bounds = array<i64: 2>, scalar_prefetch = 0 : i64, scratch_operands = 0 : i64, tpu.core_type = #tpu.core_type<tc>, window_params = [{transform_indices = @transform_0, window_bounds = array<i64: 1, 8, 256>}, {pipeline_mode = #tpu.pipeline_mode<synchronous>, transform_indices = @transform_1, window_bounds = array<i64: 1, 128>}, {pipeline_mode = #tpu.pipeline_mode<synchronous>, transform_indices = @transform_2, window_bounds = array<i64: 1, 128>}, {transform_indices = @transform_3, window_bounds = array<i64: 1, 8, 128>}]} {
    %c0 = arith.constant 0 : index
    %c0_0 = arith.constant 0 : index
    %0 = vector.load %arg2[%c0, %c0_0] : memref<1x128xf32, #tpu.memory_space<vmem>>, vector<1x128xf32>
    %1 = vector.shape_cast %0 : vector<1x128xf32> to vector<1x1x128xf32>
    %c0_1 = arith.constant 0 : index
    %c0_2 = arith.constant 0 : index
    %2 = vector.load %arg3[%c0_1, %c0_2] : memref<1x128xf32, #tpu.memory_space<vmem>>, vector<1x128xf32>
    %3 = vector.shape_cast %2 : vector<1x128xf32> to vector<1x1x128xf32>
    %c0_3 = arith.constant 0 : index
    %c0_4 = arith.constant 0 : index
    %c0_5 = arith.constant 0 : index
    %4 = vector.load %arg1[%c0_3, %c0_4, %c0_5] : memref<1x8x256xbf16, #tpu.memory_space<vmem>>, vector<1x8x128xbf16>
    %5 = arith.extf %4 : vector<1x8x128xbf16> to vector<1x8x128xf32>
    %c0_6 = arith.constant 0 : index
    %c0_7 = arith.constant 0 : index
    %c128 = arith.constant 128 : index
    %6 = vector.load %arg1[%c0_6, %c0_7, %c128] : memref<1x8x256xbf16, #tpu.memory_space<vmem>>, vector<1x8x128xbf16>
    %7 = arith.extf %6 : vector<1x8x128xbf16> to vector<1x8x128xf32>
    %8 = vector.broadcast %1 : vector<1x1x128xf32> to vector<1x8x128xf32>
    %9 = arith.mulf %5, %8 : vector<1x8x128xf32>
    %10 = vector.broadcast %3 : vector<1x1x128xf32> to vector<1x8x128xf32>
    %11 = arith.addf %9, %10 : vector<1x8x128xf32>
    %cst = arith.constant 0.000000e+00 : f32
    %12 = vector.broadcast %cst : f32 to vector<1x8x128xf32>
    %13 = arith.maximumf %11, %12 : vector<1x8x128xf32>
    %14 = vector.broadcast %1 : vector<1x1x128xf32> to vector<1x8x128xf32>
    %15 = arith.mulf %7, %14 : vector<1x8x128xf32>
    %16 = vector.broadcast %3 : vector<1x1x128xf32> to vector<1x8x128xf32>
    %17 = arith.addf %15, %16 : vector<1x8x128xf32>
    %cst_8 = arith.constant 0.000000e+00 : f32
    %18 = vector.broadcast %cst_8 : f32 to vector<1x8x128xf32>
    %19 = arith.maximumf %17, %18 : vector<1x8x128xf32>
    %c1_i32 = arith.constant 1 : i32
    %20 = tpu.dynamic_rotate %19 by %c1_i32 dim 1 : vector<1x8x128xf32>, i32 -> vector<1x8x128xf32>
    %21 = tpu.iota {dimensions = array<i32: 1>} : vector<1x8x128xi32>
    %c0_i32 = arith.constant 0 : i32
    %22 = vector.broadcast %c0_i32 : i32 to vector<1x8x128xi32>
    %23 = arith.cmpi eq, %21, %22 : vector<1x8x128xi32>
    %cst_9 = arith.constant 0.000000e+00 : f32
    %24 = vector.broadcast %cst_9 : f32 to vector<1x8x128xf32>
    %25 = arith.select %23, %24, %20 : vector<1x8x128xi1>, vector<1x8x128xf32>
    %26 = arith.maximumf %13, %19 : vector<1x8x128xf32>
    %27 = arith.maximumf %26, %25 : vector<1x8x128xf32>
    %c0_10 = arith.constant 0 : index
    %c0_11 = arith.constant 0 : index
    %c0_12 = arith.constant 0 : index
    %28 = vector.load %arg4[%c0_10, %c0_11, %c0_12] : memref<1x8x128xf32, #tpu.memory_space<vmem>>, vector<1x8x128xf32>
    tpu.vector_store %arg4[%c0_10, %c0_11, %c0_12], %27 {strides = array<i32>} : memref<1x8x128xf32, #tpu.memory_space<vmem>>, vector<1x8x128xf32>,
    return
  }
  func.func @transform_0(%arg0: i32) -> (i32, i32, i32) {
    %c0_i32 = arith.constant 0 : i32
    %c0_i32_0 = arith.constant 0 : i32
    %c0_i32_1 = arith.constant 0 : i32
    return %arg0, %c0_i32, %c0_i32_0 : i32, i32, i32
  }
  func.func @transform_1(%arg0: i32) -> (i32, i32) {
    %c0_i32 = arith.constant 0 : i32
    %c0_i32_0 = arith.constant 0 : i32
    %c0_i32_1 = arith.constant 0 : i32
    return %c0_i32, %c0_i32_0 : i32, i32
  }
  func.func @transform_2(%arg0: i32) -> (i32, i32) {
    %c0_i32 = arith.constant 0 : i32
    %c0_i32_0 = arith.constant 0 : i32
    %c0_i32_1 = arith.constant 0 : i32
    return %c0_i32, %c0_i32_0 : i32, i32
  }
  func.func @transform_3(%arg0: i32) -> (i32, i32, i32) {
    %c0_i32 = arith.constant 0 : i32
    %c0_i32_0 = arith.constant 0 : i32
    %c0_i32_1 = arith.constant 0 : i32
    return %arg0, %c0_i32, %c0_i32_0 : i32, i32, i32
  }
}

</mosaic_0001>

<llo_original>
// kernel: conv_layer.2
$region0: #{conv_layer.2}
  #allocation0 [shape = 'u32[]', space=smem, size = 0x4, offset = 0x4, fixed_abs, tag = 'smem constant byte address 0x4 - core index']
  #allocation1 [shape = 'u32[144,128]{1,0:T(1,128)}', space=vmem, size = 0x12000, scoped, tag = 'internal scratch']
  %s0 = inlined_call_operand.vmem [shape: f32[2,16,128], index: 0, kind: input, shape index: {}]
  %s1 = inlined_call_operand.vmem [shape: bf16[384,128], index: 1, kind: input, shape index: {}]
  %s2 = inlined_call_operand.vmem [shape: bf16[2,16,128], index: 2, kind: output, shape index: {0}]
  %s3 = inlined_call_operand.vmem [shape: f32[2,2,128], index: 3, kind: output, shape index: {1}]
  %4 = xla_tuple %s2, %s3
  %s5 = sld [smem:[#allocation0]]
  $region49: #{conv_layer.2} parent=0
    _
  %s7 = ssub.s32 1, %s5
  %s8 = scalar_select 0, %s7, %s5
  loop: start=0, step=1, limit=4
  $region2: #{conv_layer.2} parent=0 // loop_pre_header
    _
  $region3: #{conv_layer.2} parent=0 // loop_header
    %s10 = sphi 0, %s14
    %p11 = scmp.ge.s32.totalorder %s10, 4
    %s20 = sphi 0, %s22
    %s23 = sphi 0, %s20
    %s24 = sphi 0, %s23
    %s40 = sphi 0, %s24
    %s44 = sphi 0, %s44
    %s46 = sphi 0, %s44
    %s47 = sphi 0, %s46
    %s61 = sphi 0, %s47
    %s67 = sphi 0, %s69
    %s70 = sphi 0, %s67
    %s71 = sphi 0, %s70
    %s87 = sphi 0, %s71
    %s93 = sphi 0, %s95
    %s96 = sphi 0, %s93
    %s97 = sphi 0, %s96
    %s113 = sphi 0, %s97
  $region4: #{conv_layer.2} parent=0 // loop_header_branch
    %13 = sbr.rel (%p11) target = $region8
  $region5: #{conv_layer.2} parent=0 // loop_body
    %s15 = ssub.s32 %s10, 1
    %s16 = ssub.s32 %s10, 2
    %s17 = sadd.s32 %s10, 1
    %s18 = ssub.s32 %s10, %s17
    %p19 = scmp.eq.s32.totalorder %s18, 0
    %s21 = sadd.s32 %s20, 1
    %s22 = scalar_select %p19, %s20, %s21
    %p25 = pneg %p19
    %p26 = scmp.eq.s32.totalorder %s10, 1
    %p27 = por %p25, %p26
    %p28 = scmp.ne.s32.totalorder %s20, %s23
    %p29 = scmp.eq.s32.totalorder %s10, 0
    %p30 = por %p28, %p29
    %p31 = scmp.ne.s32.totalorder %s20, %s23
    %p32 = scmp.eq.s32.totalorder %s15, 1
    %p33 = por %p31, %p32
    %p34 = scmp.ne.s32.totalorder %s23, %s24
    %p35 = scmp.eq.s32.totalorder %s15, 0
    %p36 = por %p34, %p35
    %p37 = scmp.ne.s32.totalorder %s23, %s24
    %p38 = scmp.eq.s32.totalorder %s16, 1
    %p39 = por %p37, %p38
    %p41 = scmp.ne.s32.totalorder %s24, %s40
    %p42 = scmp.eq.s32.totalorder %s16, 0
    %p43 = por %p41, %p42
    %s45 = sadd.s32 %s44, 1
    %p48 = scmp.eq.s32.totalorder %s10, 1
    %p49 = scmp.ne.s32.totalorder %s44, %s46
    %p50 = scmp.eq.s32.totalorder %s10, 0
    %p51 = por %p49, %p50
    %p52 = scmp.ne.s32.totalorder %s44, %s46
    %p53 = scmp.eq.s32.totalorder %s15, 1
    %p54 = por %p52, %p53
    %p55 = scmp.ne.s32.totalorder %s46, %s47
    %p56 = scmp.eq.s32.totalorder %s15, 0
    %p57 = por %p55, %p56
    %p58 = scmp.ne.s32.totalorder %s46, %s47
    %p59 = scmp.eq.s32.totalorder %s16, 1
    %p60 = por %p58, %p59
    %p62 = scmp.ne.s32.totalorder %s47, %s61
    %p63 = scmp.eq.s32.totalorder %s16, 0
    %p64 = por %p62, %p63
    %s65 = ssub.s32 %s10, %s17
    %p66 = scmp.eq.s32.totalorder %s65, 0
    %s68 = sadd.s32 %s67, 1
    %s69 = scalar_select %p66, %s67, %s68
    %p72 = pneg %p66
    %p73 = scmp.eq.s32.totalorder %s10, 1
    %p74 = por %p72, %p73
    %p75 = scmp.ne.s32.totalorder %s67, %s70
    %p76 = scmp.eq.s32.totalorder %s10, 0
    %p77 = por %p75, %p76
    %p78 = scmp.ne.s32.totalorder %s67, %s70
    %p79 = scmp.eq.s32.totalorder %s15, 1
    %p80 = por %p78, %p79
    %p81 = scmp.ne.s32.totalorder %s70, %s71
    %p82 = scmp.eq.s32.totalorder %s15, 0
    %p83 = por %p81, %p82
    %p84 = scmp.ne.s32.totalorder %s70, %s71
    %p85 = scmp.eq.s32.totalorder %s16, 1
    %p86 = por %p84, %p85
    %p88 = scmp.ne.s32.totalorder %s71, %s87
    %p89 = scmp.eq.s32.totalorder %s16, 0
    %p90 = por %p88, %p89
    %s91 = ssub.s32 %s10, %s17
    %p92 = scmp.eq.s32.totalorder %s91, 0
    %s94 = sadd.s32 %s93, 1
    %s95 = scalar_select %p92, %s93, %s94
    %p98 = pneg %p92
    %p99 = scmp.eq.s32.totalorder %s10, 1
    %p100 = por %p98, %p99
    %p101 = scmp.ne.s32.totalorder %s93, %s96
    %p102 = scmp.eq.s32.totalorder %s10, 0
    %p103 = por %p101, %p102
    %p104 = scmp.ne.s32.totalorder %s93, %s96
    %p105 = scmp.eq.s32.totalorder %s15, 1
    %p106 = por %p104, %p105
    %p107 = scmp.ne.s32.totalorder %s96, %s97
    %p108 = scmp.eq.s32.totalorder %s15, 0
    %p109 = por %p107, %p108
    %p110 = scmp.ne.s32.totalorder %s96, %s97
    %p111 = scmp.eq.s32.totalorder %s16, 1
    %p112 = por %p110, %p111
    %p114 = scmp.ne.s32.totalorder %s97, %s113
    %p115 = scmp.eq.s32.totalorder %s16, 0
    %p116 = por %p114, %p115
    %p117 = scmp.le.s32.totalorder 1, %s10
    %p118 = scmp.lt.s32.totalorder %s10, 3
    %p119 = pnand %p117, %p118
    %p120 = pneg %p119
    // Predicated region
    $region9: #{conv_layer.2} parent=5 // pred_check
      _
    $region10: #{conv_layer.2} parent=5 // pred_check_branch
      %122 = sbr.rel (%p119) target = $region12
    $region11: #{conv_layer.2} parent=5 // pred_region
      %s123 = ssub.s32 %s10, 1
      // Predicated region
      $region13: #{conv_layer.2} parent=11 // pred_check
        %p124 = pneg %p57
      $region14: #{conv_layer.2} parent=11 // pred_check_branch
        %126 = sbr.rel (%p124) target = $region16
      $region15: #{conv_layer.2} parent=11 // pred_region
        _
      $region16: #{conv_layer.2} parent=11 // pred_fallthru
        _
    $region12: #{conv_layer.2} parent=5 // pred_fallthru
      _
    %p127 = scmp.lt.s32.totalorder %s10, 2
    // Predicated region
    $region17: #{conv_layer.2} parent=5 // pred_check
      %p128 = pneg %p127
    $region18: #{conv_layer.2} parent=5 // pred_check_branch
      %130 = sbr.rel (%p128) target = $region20
    $region19: #{conv_layer.2} parent=5 // pred_region
      // Predicated region
      $region21: #{conv_layer.2} parent=19 // pred_check
        %p131 = pneg %p30
      $region22: #{conv_layer.2} parent=19 // pred_check_branch
        %133 = sbr.rel (%p131) target = $region24
      $region23: #{conv_layer.2} parent=19 // pred_region
        %p134 = scmp.lt.s32.totalorder %s10, 1
        %s135 = scalar_select %p134, %s10, 1
        %s136 = smul.addr %s135, 2
        %s137 = smul.addr %s136, 8
        %s138 = scalar_lea.vmem %s0, %s137
      $region24: #{conv_layer.2} parent=19 // pred_fallthru
        _
    $region20: #{conv_layer.2} parent=5 // pred_fallthru
      _
    %p139 = scmp.le.s32.totalorder 1, %s10
    %p140 = scmp.lt.s32.totalorder %s10, 3
    %p141 = pnand %p139, %p140
    %p142 = pneg %p141
    // Predicated region
    $region25: #{conv_layer.2} parent=5 // pred_check
      _
    $region26: #{conv_layer.2} parent=5 // pred_check_branch
      %144 = sbr.rel (%p141) target = $region28
    $region27: #{conv_layer.2} parent=5 // pred_region
      %s145 = ssub.s32 %s10, 1
      %p146 = scmp.lt.s32.totalorder %s15, 1
      %s147 = scalar_select %p146, %s15, 1
      %s148 = smul.addr %s147, 2
      %s149 = smul.addr %s148, 8
      %s150 = scalar_lea.vmem %s0, %s149
      %p151 = pneg %p36
      %p152 = pneg %p33
      %p153 = pneg %p57
      %p154 = pneg %p54
      %p155 = pneg %p83
      %p156 = pneg %p80
      %p157 = scmp.lt.s32.totalorder %s15, 1
      %s158 = scalar_select %p157, %s15, 1
      %s159 = smul.addr %s158, 2
      %s160 = smul.addr %s159, 4
      %s161 = scalar_lea.vmem %s2, %s160
      %p162 = pneg %p109
      %p163 = pneg %p106
      %p164 = scmp.lt.s32.totalorder %s15, 1
      %s165 = scalar_select %p164, %s15, 1
      %s166 = smul.addr %s165, 2
      %s167 = scalar_lea.vmem %s3, %s166
      %p168 = scmp.lt.s32.totalorder %s15, 1
      %s169 = scalar_select %p168, %s15, 1
      %s170 = smul.addr %s169, 2
      %s171 = smul.addr %s170, 8
      %s172 = scalar_lea.vmem %s0, %s171
      %p173 = scmp.lt.s32.totalorder %s15, 1
      %s174 = scalar_select %p173, %s15, 1
      %s175 = smul.addr %s174, 2
      %s176 = smul.addr %s175, 4
      %s177 = scalar_lea.vmem %s2, %s176
      %p178 = scmp.lt.s32.totalorder %s15, 1
      %s179 = scalar_select %p178, %s15, 1
      %s180 = smul.addr %s179, 2
      %s181 = scalar_lea.vmem %s3, %s180
      %v183 = vld [vmem:[%s172] sm:$0xff]
      %v184 = vld [vmem:[%s172 + $0x8] sm:$0xff]
      %v185 = vrot.slane %v183, 7
      %v186 = vrot.slane %v184, 7
      %v187 = vlaneseq
      %v188 = vshrl.u32 %v187, 7
      %vm189 = vcmp.lt.s32.totalorder %v188, 1
      %v190 = vsel %vm189, %v185, %v186
      %v191 = vsel %vm189, %v186, %v185
      %v192 = vrot.slane %v183, 1
      %v193 = vrot.slane %v184, 1
      %vm194 = vcmp.lt.s32.totalorder %v188, 7
      %v195 = vsel %vm194, %v192, %v193
      %v196 = vsel %vm194, %v193, %v192
      %v197 = vpack.c.bf16 %v190, %v191
      %v198 = vpack.c.bf16 %v184, %v183
      %v199 = vpack.c.bf16 %v196, %v195
      %v200 = vld [vmem:[%s1] sm:$0xf]
      %v201 = vld [vmem:[%s1 + $0x4] sm:$0xf]
      %v202 = vld [vmem:[%s1 + $0x8] sm:$0xf]
      %v203 = vld [vmem:[%s1 + $0xc] sm:$0xf]
      %v204 = vld [vmem:[%s1 + $0x10] sm:$0xf]
      %v205 = vld [vmem:[%s1 + $0x14] sm:$0xf]
      %v206 = vld [vmem:[%s1 + $0x18] sm:$0xf]
      %v207 = vld [vmem:[%s1 + $0x1c] sm:$0xf]
      %v208 = vld [vmem:[%s1 + $0x20] sm:$0xf]
      %v209 = vld [vmem:[%s1 + $0x24] sm:$0xf]
      %v210 = vld [vmem:[%s1 + $0x28] sm:$0xf]
      %v211 = vld [vmem:[%s1 + $0x2c] sm:$0xf]
      %v212 = vld [vmem:[%s1 + $0x30] sm:$0xf]
      %v213 = vld [vmem:[%s1 + $0x34] sm:$0xf]
      %v214 = vld [vmem:[%s1 + $0x38] sm:$0xf]
      %v215 = vld [vmem:[%s1 + $0x3c] sm:$0xf]
      %v216 = vld [vmem:[%s1 + $0x40] sm:$0xf]
      %v217 = vld [vmem:[%s1 + $0x44] sm:$0xf]
      %v218 = vld [vmem:[%s1 + $0x48] sm:$0xf]
      %v219 = vld [vmem:[%s1 + $0x4c] sm:$0xf]
      %v220 = vld [vmem:[%s1 + $0x50] sm:$0xf]
      %v221 = vld [vmem:[%s1 + $0x54] sm:$0xf]
      %v222 = vld [vmem:[%s1 + $0x58] sm:$0xf]
      %v223 = vld [vmem:[%s1 + $0x5c] sm:$0xf]
      %v224 = vld [vmem:[%s1 + $0x60] sm:$0xf]
      %v225 = vld [vmem:[%s1 + $0x64] sm:$0xf]
      %v226 = vld [vmem:[%s1 + $0x68] sm:$0xf]
      %v227 = vld [vmem:[%s1 + $0x6c] sm:$0xf]
      %v228 = vld [vmem:[%s1 + $0x70] sm:$0xf]
      %v229 = vld [vmem:[%s1 + $0x74] sm:$0xf]
      %v230 = vld [vmem:[%s1 + $0x78] sm:$0xf]
      %v231 = vld [vmem:[%s1 + $0x7c] sm:$0xf]
      %v232 = vld [vmem:[%s1 + $0x80] sm:$0xf]
      %v233 = vld [vmem:[%s1 + $0x84] sm:$0xf]
      %v234 = vld [vmem:[%s1 + $0x88] sm:$0xf]
      %v235 = vld [vmem:[%s1 + $0x8c] sm:$0xf]
      %v236 = vld [vmem:[%s1 + $0x90] sm:$0xf]
      %v237 = vld [vmem:[%s1 + $0x94] sm:$0xf]
      %v238 = vld [vmem:[%s1 + $0x98] sm:$0xf]
      %v239 = vld [vmem:[%s1 + $0x9c] sm:$0xf]
      %v240 = vld [vmem:[%s1 + $0xa0] sm:$0xf]
      %v241 = vld [vmem:[%s1 + $0xa4] sm:$0xf]
      %v242 = vld [vmem:[%s1 + $0xa8] sm:$0xf]
      %v243 = vld [vmem:[%s1 + $0xac] sm:$0xf]
      %v244 = vld [vmem:[%s1 + $0xb0] sm:$0xf]
      %v245 = vld [vmem:[%s1 + $0xb4] sm:$0xf]
      %v246 = vld [vmem:[%s1 + $0xb8] sm:$0xf]
      %v247 = vld [vmem:[%s1 + $0xbc] sm:$0xf]
      %v296 = vunpack.c.l.b16 %v200
      %v297 = vunpack.c.l.b16 %v201
      %v298 = vunpack.c.l.b16 %v202
      %v299 = vunpack.c.l.b16 %v203
      %v300 = vunpack.c.l.b16 %v204
      %v301 = vunpack.c.l.b16 %v205
      %v302 = vunpack.c.l.b16 %v206
      %v303 = vunpack.c.l.b16 %v207
      %v304 = vunpack.c.l.b16 %v208
      %v305 = vunpack.c.l.b16 %v209
      %v306 = vunpack.c.l.b16 %v210
      %v307 = vunpack.c.l.b16 %v211
      %v308 = vunpack.c.l.b16 %v212
      %v309 = vunpack.c.l.b16 %v213
      %v310 = vunpack.c.l.b16 %v214
      %v311 = vunpack.c.l.b16 %v215
      %v312 = vunpack.c.l.b16 %v216
      %v313 = vunpack.c.l.b16 %v217
      %v314 = vunpack.c.l.b16 %v218
      %v315 = vunpack.c.l.b16 %v219
      %v316 = vunpack.c.l.b16 %v220
      %v317 = vunpack.c.l.b16 %v221
      %v318 = vunpack.c.l.b16 %v222
      %v319 = vunpack.c.l.b16 %v223
      %v320 = vunpack.c.l.b16 %v224
      %v321 = vunpack.c.l.b16 %v225
      %v322 = vunpack.c.l.b16 %v226
      %v323 = vunpack.c.l.b16 %v227
      %v324 = vunpack.c.l.b16 %v228
      %v325 = vunpack.c.l.b16 %v229
      %v326 = vunpack.c.l.b16 %v230
      %v327 = vunpack.c.l.b16 %v231
      %v328 = vunpack.c.l.b16 %v232
      %v329 = vunpack.c.l.b16 %v233
      %v330 = vunpack.c.l.b16 %v234
      %v331 = vunpack.c.l.b16 %v235
      %v332 = vunpack.c.l.b16 %v236
      %v333 = vunpack.c.l.b16 %v237
      %v334 = vunpack.c.l.b16 %v238
      %v335 = vunpack.c.l.b16 %v239
      %v336 = vunpack.c.l.b16 %v240
      %v337 = vunpack.c.l.b16 %v241
      %v338 = vunpack.c.l.b16 %v242
      %v339 = vunpack.c.l.b16 %v243
      %v340 = vunpack.c.l.b16 %v244
      %v341 = vunpack.c.l.b16 %v245
      %v342 = vunpack.c.l.b16 %v246
      %v343 = vunpack.c.l.b16 %v247
      %v344 = vpack.c.b16 %v297, %v296
      %v345 = vpack.c.b16 %v299, %v298
      %v346 = vpack.c.b16 %v301, %v300
      %v347 = vpack.c.b16 %v303, %v302
      %v348 = vpack.c.b16 %v305, %v304
      %v349 = vpack.c.b16 %v307, %v306
      %v350 = vpack.c.b16 %v309, %v308
      %v351 = vpack.c.b16 %v311, %v310
      %v352 = vpack.c.b16 %v313, %v312
      %v353 = vpack.c.b16 %v315, %v314
      %v354 = vpack.c.b16 %v317, %v316
      %v355 = vpack.c.b16 %v319, %v318
      %v356 = vpack.c.b16 %v321, %v320
      %v357 = vpack.c.b16 %v323, %v322
      %v358 = vpack.c.b16 %v325, %v324
      %v359 = vpack.c.b16 %v327, %v326
      %v360 = vpack.c.b16 %v329, %v328
      %v361 = vpack.c.b16 %v331, %v330
      %v362 = vpack.c.b16 %v333, %v332
      %v363 = vpack.c.b16 %v335, %v334
      %v364 = vpack.c.b16 %v337, %v336
      %v365 = vpack.c.b16 %v339, %v338
      %v366 = vpack.c.b16 %v341, %v340
      %v367 = vpack.c.b16 %v343, %v342
      %392 = vmatprep.subr.bf16.mxu0 0
      %393 = vmatpush1.bf16.msra.mxu0 %v344
      %394 = vmatprep.subr.bf16.mxu0 0
      %395 = vmatpush1.bf16.msra.mxu0 %v345
      %396 = vmatprep.subr.bf16.mxu0 0
      %397 = vmatpush1.bf16.msra.mxu0 %v346
      %398 = vmatprep.subr.bf16.mxu0 0
      %399 = vmatpush1.bf16.msra.mxu0 %v347
      %400 = vmatprep.subr.bf16.mxu0 0
      %401 = vmatpush1.bf16.msra.mxu0 %v348
      %402 = vmatprep.subr.bf16.mxu0 0
      %403 = vmatpush1.bf16.msra.mxu0 %v349
      %404 = vmatprep.subr.bf16.mxu0 0
      %405 = vmatpush1.bf16.msra.mxu0 %v350
      %406 = vmatprep.subr.bf16.mxu0 0
      %407 = vmatpush1.bf16.msra.mxu0 %v351
      %408 = vmatprep.subr.bf16.mxu0 0
      %409 = vmatpush1.bf16.msra.mxu0 %v352
      %410 = vmatprep.subr.bf16.mxu0 0
      %411 = vmatpush1.bf16.msra.mxu0 %v353
      %412 = vmatprep.subr.bf16.mxu0 0
      %413 = vmatpush1.bf16.msra.mxu0 %v354
      %414 = vmatprep.subr.bf16.mxu0 0
      %415 = vmatpush1.bf16.msra.mxu0 %v355
      %416 = vmatprep.subr.bf16.mxu0 0
      %417 = vmatpush1.bf16.msra.mxu0 %v356
      %418 = vmatprep.subr.bf16.mxu0 0
      %419 = vmatpush1.bf16.msra.mxu0 %v357
      %420 = vmatprep.subr.bf16.mxu0 0
      %421 = vmatpush1.bf16.msra.mxu0 %v358
      %422 = vmatprep.subr.bf16.mxu0 0
      %423 = vmatpush1.bf16.msra.mxu0 %v359
      %424 = vmatprep.mubr.bf16.mxu0 %v198
      %425 = vmatmul.mubr.bf16.gmra.mrb[0].mxu0 %v197
      %v426 = vpop.f32.mrb[0].mxu0
      %v427 = vadd.f32 0.0, %v426
      %v428 = vpop.f32.mrb[0].mxu0
      %v429 = vpop.f32.mrb[0].mxu0
      %v430 = vadd.f32 0.0, %v429
      %v431 = vpop.f32.mrb[0].mxu0
      %432 = vdwg.mxu0
      %433 = vmatprep.subr.bf16.mxu0 0
      %434 = vmatpush1.bf16.msra.mxu0 %v360
      %435 = vmatprep.subr.bf16.mxu0 0
      %436 = vmatpush1.bf16.msra.mxu0 %v361
      %437 = vmatprep.subr.bf16.mxu0 0
      %438 = vmatpush1.bf16.msra.mxu0 %v362
      %439 = vmatprep.subr.bf16.mxu0 0
      %440 = vmatpush1.bf16.msra.mxu0 %v363
      %441 = vmatprep.subr.bf16.mxu0 0
      %442 = vmatpush1.bf16.msra.mxu0 %v364
      %443 = vmatprep.subr.bf16.mxu0 0
      %444 = vmatpush1.bf16.msra.mxu0 %v365
      %445 = vmatprep.subr.bf16.mxu0 0
      %446 = vmatpush1.bf16.msra.mxu0 %v366
      %447 = vmatprep.subr.bf16.mxu0 0
      %448 = vmatpush1.bf16.msra.mxu0 %v367
      %449 = vmatprep.subr.bf16.mxu0 0
      %450 = vmatpush1.bf16.msra.mxu0 0
      %451 = vmatprep.subr.bf16.mxu0 0
      %452 = vmatpush1.bf16.msra.mxu0 0
      %453 = vmatprep.subr.bf16.mxu0 0
      %454 = vmatpush1.bf16.msra.mxu0 0
      %455 = vmatprep.subr.bf16.mxu0 0
      %456 = vmatpush1.bf16.msra.mxu0 0
      %457 = vmatprep.subr.bf16.mxu0 0
      %458 = vmatpush1.bf16.msra.mxu0 0
      %459 = vmatprep.subr.bf16.mxu0 0
      %460 = vmatpush1.bf16.msra.mxu0 0
      %461 = vmatprep.subr.bf16.mxu0 0
      %462 = vmatpush1.bf16.msra.mxu0 0
      %463 = vmatprep.subr.bf16.mxu0 0
      %464 = vmatpush1.bf16.msra.mxu0 0
      %465 = vmatprep.mubr.bf16.mxu0 0
      %466 = vmatmul.mubr.bf16.gmra.mrb[0].mxu0 %v199
      %v467 = vpop.f32.mrb[0].mxu0
      %v468 = vadd.f32 %v427, %v467
      %v469 = vpop.f32.mrb[0].mxu0
      %v470 = vpop.f32.mrb[0].mxu0
      %v471 = vadd.f32 %v430, %v470
      %v472 = vpop.f32.mrb[0].mxu0
      %473 = vdwg.mxu0
      %v474 = vadd.f32 %v468, %v471
      %v475 = vrot.slane %v474, 4
      %v476 = vadd.f32 %v474, %v475
      %v477 = vrot.slane %v476, 2
      %v478 = vadd.f32 %v476, %v477
      %v479 = vrot.slane %v478, 1
      %v480 = vadd.f32 %v478, %v479
      %v481 = vmul.f32 %v480, 0.0625
      %v482 = vsub.f32 %v468, %v481
      %v483 = vsub.f32 %v471, %v481
      %v484 = vmul.f32 %v482, %v482
      %v485 = vmul.f32 %v483, %v483
      %v486 = vadd.f32 %v484, %v485
      %v487 = vrot.slane %v486, 4
      %v488 = vadd.f32 %v486, %v487
      %v489 = vrot.slane %v488, 2
      %v490 = vadd.f32 %v488, %v489
      %v491 = vrot.slane %v490, 1
      %v492 = vadd.f32 %v490, %v491
      %vm493 = vcmask 1040384
      %v494 = vsel %vm493, %v480, %v492
      %495 = vst [vmem:[%s181] sm:$0x3] %v494
      %v496 = vpack.c.bf16 %v471, %v468
      %v498 = vunpack.c.l.b16 %v496
      %v499 = vunpack.c.h.b16 %v496
      %v500 = vpack.c.b16 %v498, %v498
      %v501 = vpack.c.b16 %v499, %v499
      %504 = vst [vmem:[%s177] sm:$0xf] %v500
      %505 = vst [vmem:[%s177 + $0x4] sm:$0xf] %v501
      %p506 = scmp.lt.s32.totalorder %s15, 1
      %s507 = scalar_select %p506, %s15, 1
      %s508 = smul.addr %s507, 2
      %s509 = smul.addr %s508, 4
      %s510 = scalar_lea.vmem %s2, %s509
      %p511 = scmp.lt.s32.totalorder %s15, 1
      %s512 = scalar_select %p511, %s15, 1
      %s513 = smul.addr %s512, 2
      %s514 = scalar_lea.vmem %s3, %s513
      // Predicated region
      $region29: #{conv_layer.2} parent=27 // pred_check
        %p515 = pneg %p80
      $region30: #{conv_layer.2} parent=27 // pred_check_branch
        %517 = sbr.rel (%p515) target = $region32
      $region31: #{conv_layer.2} parent=27 // pred_region
        _
      $region32: #{conv_layer.2} parent=27 // pred_fallthru
        _
      // Predicated region
      $region33: #{conv_layer.2} parent=27 // pred_check
        %p518 = pneg %p106
      $region34: #{conv_layer.2} parent=27 // pred_check_branch
        %520 = sbr.rel (%p518) target = $region36
      $region35: #{conv_layer.2} parent=27 // pred_region
        _
      $region36: #{conv_layer.2} parent=27 // pred_fallthru
        _
    $region28: #{conv_layer.2} parent=5 // pred_fallthru
      _
    %p521 = scmp.le.s32.totalorder 2, %s10
    // Predicated region
    $region37: #{conv_layer.2} parent=5 // pred_check
      %p522 = pneg %p521
    $region38: #{conv_layer.2} parent=5 // pred_check_branch
      %524 = sbr.rel (%p522) target = $region40
    $region39: #{conv_layer.2} parent=5 // pred_region
      %s525 = ssub.s32 %s10, 2
      // Predicated region
      $region41: #{conv_layer.2} parent=39 // pred_check
        %p526 = pneg %p86
      $region42: #{conv_layer.2} parent=39 // pred_check_branch
        %528 = sbr.rel (%p526) target = $region44
      $region43: #{conv_layer.2} parent=39 // pred_region
        %p529 = scmp.lt.s32.totalorder %s16, 1
        %s530 = scalar_select %p529, %s16, 1
        %s531 = smul.addr %s530, 2
        %s532 = smul.addr %s531, 4
        %s533 = scalar_lea.vmem %s2, %s532
      $region44: #{conv_layer.2} parent=39 // pred_fallthru
        _
      // Predicated region
      $region45: #{conv_layer.2} parent=39 // pred_check
        %p534 = pneg %p112
      $region46: #{conv_layer.2} parent=39 // pred_check_branch
        %536 = sbr.rel (%p534) target = $region48
      $region47: #{conv_layer.2} parent=39 // pred_region
        %p537 = scmp.lt.s32.totalorder %s16, 1
        %s538 = scalar_select %p537, %s16, 1
        %s539 = smul.addr %s538, 2
        %s540 = scalar_lea.vmem %s3, %s539
      $region48: #{conv_layer.2} parent=39 // pred_fallthru
        _
    $region40: #{conv_layer.2} parent=5 // pred_fallthru
      _
  $region6: #{conv_layer.2} parent=0 // loop_footer
    %s14 = sadd.s32 1, %s10
  $region7: #{conv_layer.2} parent=0 // loop_footer_branch
    %9 = sbr.rel target = $region3
  $region8: #{conv_layer.2} parent=0 // loop_exit
    _

// kernel: conv_layer.3
$region0: #{conv_layer.3}
  #allocation0 [shape = 'u32[]', space=smem, size = 0x4, offset = 0x4, fixed_abs, tag = 'smem constant byte address 0x4 - core index']
  #allocation1 [shape = 'u32[144,128]{1,0:T(1,128)}', space=vmem, size = 0x12000, scoped, tag = 'internal scratch']
  %s0 = inlined_call_operand.vmem [shape: bf16[2,8,256], index: 0, kind: input, shape index: {}]
  %s1 = inlined_call_operand.vmem [shape: f32[1,128], index: 1, kind: input, shape index: {}]
  %s2 = inlined_call_operand.vmem [shape: f32[1,128], index: 2, kind: input, shape index: {}]
  %s3 = inlined_call_operand.hbm [shape: f32[2,8,128], index: 3, kind: output, shape index: {}]
  %s4 = sld [smem:[#allocation0]]
  $region45: #{conv_layer.3} parent=0
    _
  %s6 = ssub.s32 1, %s4
  %s7 = scalar_select 0, %s6, %s4
  $region1: #{conv_layer.3} parent=0
    #allocation2 [shape = 'u8[8192]{0}', space=vmem, size = 0x2000, scoped, tag = 'output window, operand 0']
    #allocation3 [shape = 's32[2]{0}', space=sflag, size = 0x8, scoped, tag = 'scoped memory for conv_layer.3']
    %8 = vsyncpa [#allocation3], 0
    %s9 = scalar_lea.sflag [#allocation3], 1
    %10 = vsyncpa %s9, 0
    loop: start=0, step=1, limit=4
    $region2: #{conv_layer.3} parent=1 // loop_pre_header
      _
    $region3: #{conv_layer.3} parent=1 // loop_header
      %s12 = sphi 0, %s16
      %p13 = scmp.ge.s32.totalorder %s12, 4
      %s22 = sphi 0, %s24
      %s25 = sphi 0, %s22
      %s26 = sphi 0, %s25
      %s42 = sphi 0, %s26
      %s46 = sphi 0, %s46
      %s48 = sphi 0, %s46
      %s49 = sphi 0, %s48
      %s63 = sphi 0, %s49
      %s67 = sphi 0, %s67
      %s69 = sphi 0, %s67
      %s70 = sphi 0, %s69
      %s84 = sphi 0, %s70
      %s90 = sphi 0, %s92
      %s93 = sphi 0, %s90
      %s94 = sphi 0, %s93
      %s110 = sphi 0, %s94
    $region4: #{conv_layer.3} parent=1 // loop_header_branch
      %15 = sbr.rel (%p13) target = $region8
    $region5: #{conv_layer.3} parent=1 // loop_body
      %s17 = ssub.s32 %s12, 1
      %s18 = ssub.s32 %s12, 2
      %s19 = sadd.s32 %s12, 1
      %s20 = ssub.s32 %s12, %s19
      %p21 = scmp.eq.s32.totalorder %s20, 0
      %s23 = sadd.s32 %s22, 1
      %s24 = scalar_select %p21, %s22, %s23
      %p27 = pneg %p21
      %p28 = scmp.eq.s32.totalorder %s12, 1
      %p29 = por %p27, %p28
      %p30 = scmp.ne.s32.totalorder %s22, %s25
      %p31 = scmp.eq.s32.totalorder %s12, 0
      %p32 = por %p30, %p31
      %p33 = scmp.ne.s32.totalorder %s22, %s25
      %p34 = scmp.eq.s32.totalorder %s17, 1
      %p35 = por %p33, %p34
      %p36 = scmp.ne.s32.totalorder %s25, %s26
      %p37 = scmp.eq.s32.totalorder %s17, 0
      %p38 = por %p36, %p37
      %p39 = scmp.ne.s32.totalorder %s25, %s26
      %p40 = scmp.eq.s32.totalorder %s18, 1
      %p41 = por %p39, %p40
      %p43 = scmp.ne.s32.totalorder %s26, %s42
      %p44 = scmp.eq.s32.totalorder %s18, 0
      %p45 = por %p43, %p44
      %s47 = sadd.s32 %s46, 1
      %p50 = scmp.eq.s32.totalorder %s12, 1
      %p51 = scmp.ne.s32.totalorder %s46, %s48
      %p52 = scmp.eq.s32.totalorder %s12, 0
      %p53 = por %p51, %p52
      %p54 = scmp.ne.s32.totalorder %s46, %s48
      %p55 = scmp.eq.s32.totalorder %s17, 1
      %p56 = por %p54, %p55
      %p57 = scmp.ne.s32.totalorder %s48, %s49
      %p58 = scmp.eq.s32.totalorder %s17, 0
      %p59 = por %p57, %p58
      %p60 = scmp.ne.s32.totalorder %s48, %s49
      %p61 = scmp.eq.s32.totalorder %s18, 1
      %p62 = por %p60, %p61
      %p64 = scmp.ne.s32.totalorder %s49, %s63
      %p65 = scmp.eq.s32.totalorder %s18, 0
      %p66 = por %p64, %p65
      %s68 = sadd.s32 %s67, 1
      %p71 = scmp.eq.s32.totalorder %s12, 1
      %p72 = scmp.ne.s32.totalorder %s67, %s69
      %p73 = scmp.eq.s32.totalorder %s12, 0
      %p74 = por %p72, %p73
      %p75 = scmp.ne.s32.totalorder %s67, %s69
      %p76 = scmp.eq.s32.totalorder %s17, 1
      %p77 = por %p75, %p76
      %p78 = scmp.ne.s32.totalorder %s69, %s70
      %p79 = scmp.eq.s32.totalorder %s17, 0
      %p80 = por %p78, %p79
      %p81 = scmp.ne.s32.totalorder %s69, %s70
      %p82 = scmp.eq.s32.totalorder %s18, 1
      %p83 = por %p81, %p82
      %p85 = scmp.ne.s32.totalorder %s70, %s84
      %p86 = scmp.eq.s32.totalorder %s18, 0
      %p87 = por %p85, %p86
      %s88 = ssub.s32 %s12, %s19
      %p89 = scmp.eq.s32.totalorder %s88, 0
      %s91 = sadd.s32 %s90, 1
      %s92 = scalar_select %p89, %s90, %s91
      %p95 = pneg %p89
      %p96 = scmp.eq.s32.totalorder %s12, 1
      %p97 = por %p95, %p96
      %p98 = scmp.ne.s32.totalorder %s90, %s93
      %p99 = scmp.eq.s32.totalorder %s12, 0
      %p100 = por %p98, %p99
      %p101 = scmp.ne.s32.totalorder %s90, %s93
      %p102 = scmp.eq.s32.totalorder %s17, 1
      %p103 = por %p101, %p102
      %p104 = scmp.ne.s32.totalorder %s93, %s94
      %p105 = scmp.eq.s32.totalorder %s17, 0
      %p106 = por %p104, %p105
      %p107 = scmp.ne.s32.totalorder %s93, %s94
      %p108 = scmp.eq.s32.totalorder %s18, 1
      %p109 = por %p107, %p108
      %p111 = scmp.ne.s32.totalorder %s94, %s110
      %p112 = scmp.eq.s32.totalorder %s18, 0
      %p113 = por %p111, %p112
      %p114 = scmp.le.s32.totalorder 1, %s12
      %p115 = scmp.lt.s32.totalorder %s12, 3
      %p116 = pnand %p114, %p115
      %p117 = pneg %p116
      // Predicated region
      $region9: #{conv_layer.3} parent=5 // pred_check
        _
      $region10: #{conv_layer.3} parent=5 // pred_check_branch
        %119 = sbr.rel (%p116) target = $region12
      $region11: #{conv_layer.3} parent=5 // pred_region
        %s120 = ssub.s32 %s12, 1
        // Predicated region
        $region13: #{conv_layer.3} parent=11 // pred_check
          %p121 = pneg %p59
        $region14: #{conv_layer.3} parent=11 // pred_check_branch
          %123 = sbr.rel (%p121) target = $region16
        $region15: #{conv_layer.3} parent=11 // pred_region
          _
        $region16: #{conv_layer.3} parent=11 // pred_fallthru
          _
        // Predicated region
        $region17: #{conv_layer.3} parent=11 // pred_check
          %p124 = pneg %p80
        $region18: #{conv_layer.3} parent=11 // pred_check_branch
          %126 = sbr.rel (%p124) target = $region20
        $region19: #{conv_layer.3} parent=11 // pred_region
          _
        $region20: #{conv_layer.3} parent=11 // pred_fallthru
          _
      $region12: #{conv_layer.3} parent=5 // pred_fallthru
        _
      %p127 = scmp.lt.s32.totalorder %s12, 2
      // Predicated region
      $region21: #{conv_layer.3} parent=5 // pred_check
        %p128 = pneg %p127
      $region22: #{conv_layer.3} parent=5 // pred_check_branch
        %130 = sbr.rel (%p128) target = $region24
      $region23: #{conv_layer.3} parent=5 // pred_region
        // Predicated region
        $region25: #{conv_layer.3} parent=23 // pred_check
          %p131 = pneg %p32
        $region26: #{conv_layer.3} parent=23 // pred_check_branch
          %133 = sbr.rel (%p131) target = $region28
        $region27: #{conv_layer.3} parent=23 // pred_region
          %p134 = scmp.lt.s32.totalorder %s12, 1
          %s135 = scalar_select %p134, %s12, 1
          %s136 = smul.addr %s135, 2
          %s137 = smul.addr %s136, 4
          %s138 = scalar_lea.vmem %s0, %s137
        $region28: #{conv_layer.3} parent=23 // pred_fallthru
          _
      $region24: #{conv_layer.3} parent=5 // pred_fallthru
        _
      %p139 = scmp.le.s32.totalorder 1, %s12
      %p140 = scmp.lt.s32.totalorder %s12, 3
      %p141 = pnand %p139, %p140
      %p142 = pneg %p141
      // Predicated region
      $region29: #{conv_layer.3} parent=5 // pred_check
        _
      $region30: #{conv_layer.3} parent=5 // pred_check_branch
        %144 = sbr.rel (%p141) target = $region32
      $region31: #{conv_layer.3} parent=5 // pred_region
        %s145 = ssub.s32 %s12, 1
        %p146 = scmp.lt.s32.totalorder %s17, 1
        %s147 = scalar_select %p146, %s17, 1
        %s148 = smul.addr %s147, 2
        %s149 = smul.addr %s148, 4
        %s150 = scalar_lea.vmem %s0, %s149
        %p151 = pneg %p38
        %p152 = pneg %p35
        %p153 = pneg %p59
        %p154 = pneg %p56
        %p155 = pneg %p80
        %p156 = pneg %p77
        %p157 = pneg %p106
        %p158 = pneg %p103
        %s159 = sand.u32 %s93, 1
        %s160 = scalar_lea.sflag [#allocation3], %s159
        %s161 = sand.u32 %s93, 1
        %s162 = smul.addr %s161, 8
        %s163 = scalar_lea.vmem [#allocation2], %s162
        %p164 = scmp.lt.s32.totalorder %s17, 1
        %s165 = scalar_select %p164, %s17, 1
        %s166 = smul.addr %s165, 2
        %s167 = smul.addr %s166, 4
        %s168 = scalar_lea.vmem %s0, %s167
        %v169 = vld [vmem:[%s1] sm:$0x1]
        %v170 = vld [vmem:[%s2] sm:$0x1]
        %v171 = vld [vmem:[%s168] sm:$0xf]
        %v172 = vunpack.c.l.bf16 %v171
        %v173 = vld [vmem:[%s168 + $0x4] sm:$0xf]
        %v174 = vunpack.c.l.bf16 %v173
        %v176 = vlaneseq
        %v177 = vshrl.u32 %v176, 7
        %v178 = vsub.s32 0, %v177
        %v179 = vrot.slane %v169, %v178
        %v181 = vmul.f32 %v172, %v179
        %v183 = vlaneseq
        %v184 = vshrl.u32 %v183, 7
        %v185 = vsub.s32 0, %v184
        %v186 = vrot.slane %v170, %v185
        %v188 = vadd.f32 %v181, %v186
        %v189 = vmax.f32 %v188, 0.0
        %v190 = vmul.f32 %v174, %v179
        %v191 = vadd.f32 %v190, %v186
        %v192 = vmax.f32 %v191, 0.0
        %v193 = vrot.slane %v192, 7
        %v194 = vlaneseq
        %v195 = vshrl.u32 %v194, 7
        %vm196 = vcmp.eq.s32.totalorder %v195, 0
        %v197 = vsel %vm196, 0.0, %v193
        %v198 = vmax.f32 %v189, %v192
        %v199 = vmax.f32 %v198, %v197
        %200 = vst [vmem:[%s163] sm:$0xff] %v199
        %s201 = sand.u32 %s93, 1
        %s202 = scalar_lea.sflag [#allocation3], %s201
        %s203 = sand.u32 %s93, 1
        %s204 = smul.addr %s203, 8
        %s205 = scalar_lea.vmem [#allocation2], %s204
        // Predicated region
        $region33: #{conv_layer.3} parent=31 // pred_check
          %p206 = pneg %p103
        $region34: #{conv_layer.3} parent=31 // pred_check_branch
          %208 = sbr.rel (%p206) target = $region36
        $region35: #{conv_layer.3} parent=31 // pred_region
          %s210 = ssub.s32 128, 128
          %211 = vsyncadd %s202, %s210
          %s212 = smul.addr %s17, 128
          %s213 = scalar_lea.hbm %s3, %s212
          %s215 = sshll.u32 %s205, 4
          %s216 = int_to_ptr.vmem [resolvable:$true] %s215
          %218 = dma.vmem_to_hbm [thread:$0]  %s216, 128, %s213, %s202
        $region36: #{conv_layer.3} parent=31 // pred_fallthru
          _
      $region32: #{conv_layer.3} parent=5 // pred_fallthru
        _
      %p219 = scmp.le.s32.totalorder 2, %s12
      // Predicated region
      $region37: #{conv_layer.3} parent=5 // pred_check
        %p220 = pneg %p219
      $region38: #{conv_layer.3} parent=5 // pred_check_branch
        %222 = sbr.rel (%p220) target = $region40
      $region39: #{conv_layer.3} parent=5 // pred_region
        %s223 = ssub.s32 %s12, 2
        // Predicated region
        $region41: #{conv_layer.3} parent=39 // pred_check
          %p224 = pneg %p109
        $region42: #{conv_layer.3} parent=39 // pred_check_branch
          %226 = sbr.rel (%p224) target = $region44
        $region43: #{conv_layer.3} parent=39 // pred_region
          %s227 = sand.u32 %s94, 1
          %s228 = scalar_lea.sflag [#allocation3], %s227
          %s229 = sand.u32 %s94, 1
          %s230 = smul.addr %s229, 8
          %s231 = scalar_lea.vmem [#allocation2], %s230
          %232 = dma.done %s228, 128
        $region44: #{conv_layer.3} parent=39 // pred_fallthru
          _
      $region40: #{conv_layer.3} parent=5 // pred_fallthru
        _
    $region6: #{conv_layer.3} parent=1 // loop_footer
      %s16 = sadd.s32 1, %s12
    $region7: #{conv_layer.3} parent=1 // loop_footer_branch
      %11 = sbr.rel target = $region3
    $region8: #{conv_layer.3} parent=1 // loop_exit
      _
    %233 = vsyncpa [#allocation3], 1
    %s234 = scalar_lea.sflag [#allocation3], 1
    %235 = vsyncpa %s234, 1

</llo_original>
